<compile_context>
chip_gen: v6e
topology: v6e:2x2x1
jax: 0.10.0
libtpu: 0.0.40
codegen_flags: <defaults>
</compile_context>

<pallas_src>
import jax
import jax.numpy as jnp
from jax.experimental import pallas as pl
from jax.experimental.pallas import tpu as pltpu


def _round_up(x, m):
    return (x + m - 1) // m * m


def _mlp_classifier_kernel(x_ref, w1_ref, b1_ref, w2_ref, b2_ref, o_ref, h_acc):
    k = pl.program_id(1)

    @pl.when(k == 0)
    def _():
        h_acc[...] = jnp.zeros_like(h_acc)

    # featurizer partial sum: (tb, tk) @ (tk, H_p) on the MXU, f32 accumulation
    h_acc[...] += jnp.dot(x_ref[...], w1_ref[...],
                          preferred_element_type=jnp.float32)

    @pl.when(k == pl.num_programs(1) - 1)
    def _():
        # bias + ReLU kept in f32 (elementwise work stays off the bf16 path)
        h = jnp.maximum(h_acc[...] + b1_ref[...], 0.0)
        # classifier: cast activations to the weight dtype only for the MXU input
        logits = jnp.dot(h.astype(w2_ref.dtype), w2_ref[...],
                         preferred_element_type=jnp.float32)
        o_ref[...] = (logits + b2_ref[...]).astype(o_ref.dtype)


def pack_params(w1, b1, w2, b2, *, weight_dtype=jnp.bfloat16, tk_max=512):
    """Pad + cast parameters ONCE (call at init, reuse across forwards)."""
    D, H = w1.shape
    C = w2.shape[1]
    tk = min(tk_max, _round_up(D, 128))       # contraction tile (multiple of 128)
    D_p = _round_up(D, tk)                    # so D_p % tk == 0
    H_p = _round_up(H, 128)
    C_p = _round_up(C, 128)                   # lane-dense output -> unmasked stores

    w1p = jnp.zeros((D_p, H_p), weight_dtype).at[:D, :H].set(
        w1.astype(weight_dtype))
    b1p = jnp.zeros((1, H_p), jnp.float32).at[:, :H].set(
        jnp.reshape(b1, (1, -1)).astype(jnp.float32))
    w2p = jnp.zeros((H_p, C_p), weight_dtype).at[:H, :C].set(
        w2.astype(weight_dtype))
    b2p = jnp.zeros((1, C_p), jnp.float32).at[:, :C].set(
        jnp.reshape(b2, (1, -1)).astype(jnp.float32))

    return dict(w1p=w1p, b1p=b1p, w2p=w2p, b2p=b2p,
                D=D, H=H, C=C, D_p=D_p, H_p=H_p, C_p=C_p, tk=tk,
                weight_dtype=weight_dtype)


def algorithm_predict(x_nchw, packed, *, tb_max=256):
    """ERM-style forward: flatten NCHW -> linear+ReLU featurizer -> classifier."""
    weight_dtype = packed["weight_dtype"]
    D, C = packed["D"], packed["C"]
    D_p, H_p, C_p, tk = packed["D_p"], packed["H_p"], packed["C_p"], packed["tk"]
    w1p, b1p, w2p, b2p = packed["w1p"], packed["b1p"], packed["w2p"], packed["b2p"]

    B = x_nchw.shape[0]
    x_flat = x_nchw.reshape(B, -1)            # row-major flatten == torch .view(B,-1)
    assert x_flat.shape[1] == D

    # ---- activation layout plumbing (weights were packed once, elsewhere) ----
    tb = min(tb_max, _round_up(B, 16))        # bf16 sublane pack is (16, 128)
    B_p = _round_up(B, tb)
    if B_p == B and D_p == D:
        xp = x_flat.astype(weight_dtype)      # no padding round-trip needed
    else:
        xp = jnp.zeros((B_p, D_p), weight_dtype).at[:B, :D].set(
            x_flat.astype(weight_dtype))

    nb = B_p // tb
    nk = D_p // tk
    grid = (nb, nk)

    # Small-batch inference: keep the work on one TensorCore so a v7x megacore
    # split does not duplicate the weight DMA traffic.
    batch_sem = "parallel" if (nb > 1 and B_p >= 512) else "arbitrary"

    itemsize = jnp.dtype(weight_dtype).itemsize
    # VMEM footprint: double-buffered tiles + f32 hidden accumulator.
    tile_bytes = (2 * tb * tk * itemsize        # x tiles
                  + 2 * tk * H_p * itemsize     # w1 tiles
                  + 2 * H_p * 4                 # b1
                  + 2 * H_p * C_p * itemsize    # w2
                  + 2 * C_p * 4                 # b2
                  + 2 * tb * C_p * 4            # out tiles
                  + tb * H_p * 4)               # accumulator scratch
    vmem_limit = min(max(tile_bytes + (4 << 20), 16 << 20), 100 << 20)

    cost = pl.CostEstimate(
        flops=2 * B_p * (D_p * H_p + H_p * C_p),
        transcendentals=0,
        bytes_accessed=(B_p * D_p * itemsize
                        + nb * D_p * H_p * itemsize      # w1 streamed per batch tile
                        + H_p * C_p * itemsize
                        + (H_p + C_p) * 4
                        + B_p * C_p * 4))

    out = pl.pallas_call(
        _mlp_classifier_kernel,
        out_shape=jax.ShapeDtypeStruct((B_p, C_p), jnp.float32),
        grid_spec=pltpu.PrefetchScalarGridSpec(
            num_scalar_prefetch=0,
            grid=grid,
            in_specs=[
                # activations: tiled over (batch, contraction)
                pl.BlockSpec((tb, tk), lambda i, k: (i, k)),
                # featurizer weights: streamed along the contraction axis
                pl.BlockSpec((tk, H_p), lambda i, k: (k, 0)),
                # biases / classifier weights: same block every step -> resident
                pl.BlockSpec((1, H_p), lambda i, k: (0, 0)),
                pl.BlockSpec((H_p, C_p), lambda i, k: (0, 0)),
                pl.BlockSpec((1, C_p), lambda i, k: (0, 0)),
            ],
            out_specs=pl.BlockSpec((tb, C_p), lambda i, k: (i, 0)),
            scratch_shapes=[pltpu.VMEM((tb, H_p), jnp.float32)],
        ),
        compiler_params=pltpu.CompilerParams(
            dimension_semantics=(batch_sem, "arbitrary"),
            vmem_limit_bytes=int(vmem_limit)),
        cost_estimate=cost,
    )(xp, w1p, b1p, w2p, b2p)

    # slice padding back off
    return out[:B, :C]


if __name__ == "__main__":
    # Small shapes consistent with the module's __init__ signature:
    #   input_shape = (4, 16, 16), num_classes = 8, batch = 2
    key = jax.random.PRNGKey(0)
    k_x, k_w1, k_b1, k_w2, k_b2 = jax.random.split(key, 5)

    B, Cin, Himg, Wimg = 2, 4, 16, 16
    num_classes = 8
    hidden = 128
    D = Cin * Himg * Wimg                     # 1024 flattened features

    x = jax.random.normal(k_x, (B, Cin, Himg, Wimg), dtype=jnp.float32)

    # Deterministic synthetic parameters (featurizer + classifier).
    w1 = jax.random.normal(k_w1, (D, hidden), dtype=jnp.float32) * 0.02
    b1 = jax.random.normal(k_b1, (1, hidden), dtype=jnp.float32) * 0.01
    w2 = jax.random.normal(k_w2, (hidden, num_classes), dtype=jnp.float32) * 0.02
    b2 = jax.random.normal(k_b2, (1, num_classes), dtype=jnp.float32) * 0.01

    # Pack (pad + cast) the parameters ONCE; reused across every forward call.
    packed = pack_params(w1, b1, w2, b2)
    jax.block_until_ready(packed["w1p"])

    logits = algorithm_predict(x, packed)
    jax.block_until_ready(logits)
    assert logits.shape == (B, num_classes)

    # Reference 1: pure-f32 forward (PyTorch semantics). bf16 MXU inputs with
    # f32 accumulation -> small deviation, so loose tolerance here.
    ref_f32 = jnp.maximum(x.reshape(B, -1) @ w1 + b1, 0.0) @ w2 + b2
    assert jnp.allclose(logits, ref_f32, atol=5e-2, rtol=5e-2)

    # Reference 2: same bf16 casting as the kernel (tight tolerance).
    xb = x.reshape(B, -1).astype(jnp.bfloat16)
    hb = jnp.maximum(
        jnp.dot(xb, w1.astype(jnp.bfloat16),
                preferred_element_type=jnp.float32) + b1, 0.0)
    ref_bf16 = jnp.dot(hb.astype(jnp.bfloat16), w2.astype(jnp.bfloat16),
                       preferred_element_type=jnp.float32) + b2
    assert jnp.allclose(logits, ref_bf16, atol=1e-2, rtol=1e-2)

    print("KERNEL_OK")
</pallas_src>

<mosaic_0001>
module attributes {stable_mosaic.version = 11 : i64} {
  func.func @_mlp_classifier_kernel(%arg0: i32, %arg1: i32, %arg2: memref<16x512xbf16, #tpu.memory_space<vmem>>, %arg3: memref<512x128xbf16, #tpu.memory_space<vmem>>, %arg4: memref<1x128xf32, #tpu.memory_space<vmem>>, %arg5: memref<128x128xbf16, #tpu.memory_space<vmem>>, %arg6: memref<1x128xf32, #tpu.memory_space<vmem>>, %arg7: memref<16x128xf32, #tpu.memory_space<vmem>>, %arg8: memref<16x128xf32, #tpu.memory_space<vmem>>) attributes {dimension_semantics = [#tpu.dimension_semantics<arbitrary>, #tpu.dimension_semantics<arbitrary>], iteration_bounds = array<i64: 1, 2>, scalar_prefetch = 0 : i64, scratch_operands = 1 : i64, tpu.core_type = #tpu.core_type<tc>, window_params = [{transform_indices = @transform_0, window_bounds = array<i64: 16, 512>}, {transform_indices = @transform_1, window_bounds = array<i64: 512, 128>}, {pipeline_mode = #tpu.pipeline_mode<synchronous>, transform_indices = @transform_2, window_bounds = array<i64: 1, 128>}, {pipeline_mode = #tpu.pipeline_mode<synchronous>, transform_indices = @transform_3, window_bounds = array<i64: 128, 128>}, {pipeline_mode = #tpu.pipeline_mode<synchronous>, transform_indices = @transform_4, window_bounds = array<i64: 1, 128>}, {transform_indices = @transform_5, window_bounds = array<i64: 16, 128>}]} {
    %c0_i32 = arith.constant 0 : i32
    %0 = arith.cmpi eq, %arg1, %c0_i32 : i32
    %1 = arith.extui %0 : i1 to i32
    %c0_i32_0 = arith.constant 0 : i32
    %2 = arith.cmpi ne, %1, %c0_i32_0 : i32
    scf.if %2 {
      %cst_9 = arith.constant 0.000000e+00 : f32
      %12 = vector.broadcast %cst_9 : f32 to vector<16x128xf32>
      %c0_10 = arith.constant 0 : index
      %c0_11 = arith.constant 0 : index
      %13 = vector.load %arg8[%c0_10, %c0_11] : memref<16x128xf32, #tpu.memory_space<vmem>>, vector<16x128xf32>
      tpu.vector_store %arg8[%c0_10, %c0_11], %12 {strides = array<i32>} : memref<16x128xf32, #tpu.memory_space<vmem>>, vector<16x128xf32>,
    } else {
    }
    %c0 = arith.constant 0 : index
    %c0_1 = arith.constant 0 : index
    %3 = vector.load %arg8[%c0, %c0_1] : memref<16x128xf32, #tpu.memory_space<vmem>>, vector<16x128xf32>
    %c0_2 = arith.constant 0 : index
    %c0_3 = arith.constant 0 : index
    %4 = vector.load %arg2[%c0_2, %c0_3] : memref<16x512xbf16, #tpu.memory_space<vmem>>, vector<16x512xbf16>
    %c0_4 = arith.constant 0 : index
    %c0_5 = arith.constant 0 : index
    %5 = vector.load %arg3[%c0_4, %c0_5] : memref<512x128xbf16, #tpu.memory_space<vmem>>, vector<512x128xbf16>
    %cst = arith.constant dense<0.000000e+00> : vector<16x128xf32>
    %6 = tpu.matmul %4, %5, %cst {dimension_numbers = #tpu.dot_dimension_numbers<[1], [0], [0], [1], [0, 0, 1, 1], [], []>} : vector<16x512xbf16>, vector<512x128xbf16>, vector<16x128xf32> -> vector<16x128xf32>
    %7 = arith.addf %3, %6 : vector<16x128xf32>
    %c0_6 = arith.constant 0 : index
    %c0_7 = arith.constant 0 : index
    %8 = vector.load %arg8[%c0_6, %c0_7] : memref<16x128xf32, #tpu.memory_space<vmem>>, vector<16x128xf32>
    tpu.vector_store %arg8[%c0_6, %c0_7], %7 {strides = array<i32>} : memref<16x128xf32, #tpu.memory_space<vmem>>, vector<16x128xf32>,
    %c1_i32 = arith.constant 1 : i32
    %9 = arith.cmpi eq, %arg1, %c1_i32 : i32
    %10 = arith.extui %9 : i1 to i32
    %c0_i32_8 = arith.constant 0 : i32
    %11 = arith.cmpi ne, %10, %c0_i32_8 : i32
    scf.if %11 {
      %c0_9 = arith.constant 0 : index
      %c0_10 = arith.constant 0 : index
      %12 = vector.load %arg8[%c0_9, %c0_10] : memref<16x128xf32, #tpu.memory_space<vmem>>, vector<16x128xf32>
      %c0_11 = arith.constant 0 : index
      %c0_12 = arith.constant 0 : index
      %13 = vector.load %arg4[%c0_11, %c0_12] : memref<1x128xf32, #tpu.memory_space<vmem>>, vector<1x128xf32>
      %14 = vector.broadcast %13 : vector<1x128xf32> to vector<16x128xf32>
      %15 = arith.addf %12, %14 : vector<16x128xf32>
      %cst_13 = arith.constant 0.000000e+00 : f32
      %16 = vector.broadcast %cst_13 : f32 to vector<16x128xf32>
      %17 = arith.maximumf %15, %16 : vector<16x128xf32>
      %18 = arith.truncf %17 : vector<16x128xf32> to vector<16x128xbf16>
      %c0_14 = arith.constant 0 : index
      %c0_15 = arith.constant 0 : index
      %19 = vector.load %arg5[%c0_14, %c0_15] : memref<128x128xbf16, #tpu.memory_space<vmem>>, vector<128x128xbf16>
      %cst_16 = arith.constant dense<0.000000e+00> : vector<16x128xf32>
      %20 = tpu.matmul %18, %19, %cst_16 {dimension_numbers = #tpu.dot_dimension_numbers<[1], [0], [0], [1], [0, 0, 1, 1], [], []>} : vector<16x128xbf16>, vector<128x128xbf16>, vector<16x128xf32> -> vector<16x128xf32>
      %c0_17 = arith.constant 0 : index
      %c0_18 = arith.constant 0 : index
      %21 = vector.load %arg6[%c0_17, %c0_18] : memref<1x128xf32, #tpu.memory_space<vmem>>, vector<1x128xf32>
      %22 = vector.broadcast %21 : vector<1x128xf32> to vector<16x128xf32>
      %23 = arith.addf %20, %22 : vector<16x128xf32>
      %c0_19 = arith.constant 0 : index
      %c0_20 = arith.constant 0 : index
      %24 = vector.load %arg7[%c0_19, %c0_20] : memref<16x128xf32, #tpu.memory_space<vmem>>, vector<16x128xf32>
      tpu.vector_store %arg7[%c0_19, %c0_20], %23 {strides = array<i32>} : memref<16x128xf32, #tpu.memory_space<vmem>>, vector<16x128xf32>,
    } else {
    }
    return
  }
  func.func @transform_0(%arg0: i32, %arg1: i32) -> (i32, i32) {
    %c0_i32 = arith.constant 0 : i32
    return %arg0, %arg1 : i32, i32
  }
  func.func @transform_1(%arg0: i32, %arg1: i32) -> (i32, i32) {
    %c0_i32 = arith.constant 0 : i32
    %c0_i32_0 = arith.constant 0 : i32
    return %arg1, %c0_i32 : i32, i32
  }
  func.func @transform_2(%arg0: i32, %arg1: i32) -> (i32, i32) {
    %c0_i32 = arith.constant 0 : i32
    %c0_i32_0 = arith.constant 0 : i32
    %c0_i32_1 = arith.constant 0 : i32
    return %c0_i32, %c0_i32_0 : i32, i32
  }
  func.func @transform_3(%arg0: i32, %arg1: i32) -> (i32, i32) {
    %c0_i32 = arith.constant 0 : i32
    %c0_i32_0 = arith.constant 0 : i32
    %c0_i32_1 = arith.constant 0 : i32
    return %c0_i32, %c0_i32_0 : i32, i32
  }
  func.func @transform_4(%arg0: i32, %arg1: i32) -> (i32, i32) {
    %c0_i32 = arith.constant 0 : i32
    %c0_i32_0 = arith.constant 0 : i32
    %c0_i32_1 = arith.constant 0 : i32
    return %c0_i32, %c0_i32_0 : i32, i32
  }
  func.func @transform_5(%arg0: i32, %arg1: i32) -> (i32, i32) {
    %c0_i32 = arith.constant 0 : i32
    %c0_i32_0 = arith.constant 0 : i32
    return %arg0, %c0_i32 : i32, i32
  }
}

</mosaic_0001>

<llo_original>
// kernel: tpu_custom_call.1
$region0: #{tpu_custom_call.1}
  #allocation0 [shape = 'u32[]', space=smem, size = 0x4, offset = 0x4, fixed_abs, tag = 'smem constant byte address 0x4 - core index']
  #allocation1 [shape = 'u32[144,128]{1,0:T(1,128)}', space=vmem, size = 0x12000, scoped, tag = 'internal scratch']
  #allocation2 [shape = 'f32[16,128]{1,0:T(8,128)}', space=vmem, size = 0x2000, scoped, tag = 'scratch operand']
  %s0 = inlined_call_operand.hbm [shape: bf16[16,1024], index: 0, kind: input, shape index: {}]
  %s1 = inlined_call_operand.hbm [shape: bf16[1024,128], index: 1, kind: input, shape index: {}]
  %s2 = inlined_call_operand.vmem [shape: f32[1,128], index: 2, kind: input, shape index: {}]
  %s3 = inlined_call_operand.hbm [shape: bf16[128,128], index: 3, kind: input, shape index: {}]
  %s4 = inlined_call_operand.vmem [shape: f32[1,128], index: 4, kind: input, shape index: {}]
  %s5 = inlined_call_operand.hbm [shape: f32[16,128], index: 5, kind: output, shape index: {}]
  %s6 = sld [smem:[#allocation0]]
  $region73: #{tpu_custom_call.1} parent=0
    _
  %s8 = ssub.s32 1, %s6
  %s9 = scalar_select 0, %s8, %s6
  $region1: #{tpu_custom_call.1} parent=0
    #allocation3 [shape = 'u8[32768]{0}', space=vmem, size = 0x8000, scoped, tag = 'input window, operand 0']
    #allocation4 [shape = 's32[2]{0}', space=sflag, size = 0x8, scoped, tag = 'scoped memory for tpu_custom_call.1']
    #allocation5 [shape = 's32[2]{0}', space=sflag, size = 0x8, scoped, tag = 'scoped memory for tpu_custom_call.1']
    #allocation6 [shape = 'u8[262144]{0}', space=vmem, size = 0x40000, scoped, tag = 'input window, operand 1']
    #allocation7 [shape = 's32[2]{0}', space=sflag, size = 0x8, scoped, tag = 'scoped memory for tpu_custom_call.1']
    #allocation8 [shape = 'u8[32768]{0}', space=vmem, size = 0x8000, scoped, tag = 'input window, operand 3, single buffered']
    #allocation9 [shape = 'u8[8192]{0}', space=vmem, size = 0x2000, scoped, tag = 'output window, operand 0, single buffered']
    %10 = vsyncpa [#allocation4], 0
    %s11 = scalar_lea.sflag [#allocation4], 1
    %12 = vsyncpa %s11, 0
    %13 = vsyncpa [#allocation7], 0
    %s14 = scalar_lea.sflag [#allocation7], 1
    %15 = vsyncpa %s14, 0
    %16 = vsyncpa [#allocation5], 0
    loop: start=0, step=1, limit=4
    $region2: #{tpu_custom_call.1} parent=1 // loop_pre_header
      _
    $region3: #{tpu_custom_call.1} parent=1 // loop_header
      %s18 = sphi 0, %s22
      %p19 = scmp.ge.s32.totalorder %s18, 4
      %s25 = sphi 0, %s37
      %s26 = sphi 0, %s33
      %s27 = sphi 0, %s25
      %s28 = sphi 0, %s26
      %s29 = sphi 0, %s27
      %s30 = sphi 0, %s28
      %s42 = sphi 0, %s44
      %s45 = sphi 0, %s42
      %s46 = sphi 0, %s45
      %s62 = sphi 0, %s46
      %s68 = sphi 0, %s70
      %s71 = sphi 0, %s68
      %s72 = sphi 0, %s71
      %s88 = sphi 0, %s72
      %s92 = sphi 0, %s92
      %s94 = sphi 0, %s92
      %s95 = sphi 0, %s94
      %s109 = sphi 0, %s95
      %s113 = sphi 0, %s113
      %s115 = sphi 0, %s113
      %s116 = sphi 0, %s115
      %s130 = sphi 0, %s116
      %s134 = sphi 0, %s134
      %s136 = sphi 0, %s134
      %s137 = sphi 0, %s136
      %s151 = sphi 0, %s137
      %s157 = sphi 0, %s159
      %s160 = sphi 0, %s157
      %s161 = sphi 0, %s160
      %s177 = sphi 0, %s161
    $region4: #{tpu_custom_call.1} parent=1 // loop_header_branch
      %21 = sbr.rel (%p19) target = $region8
    $region5: #{tpu_custom_call.1} parent=1 // loop_body
      %s23 = ssub.s32 %s18, 1
      %s24 = ssub.s32 %s18, 2
      %s31 = sadd.s32 1, %s26
      %p32 = scmp.ge.s32.totalorder %s31, 2
      %s33 = scalar_select %p32, 0, %s31
      %s34 = sadd.s32 1, %s25
      %s35 = scalar_select %p32, %s34, %s25
      %p36 = scmp.ge.s32.totalorder %s35, 1
      %s37 = scalar_select %p36, 0, %s35
      %s38 = ssub.s32 %s25, %s37
      %s39 = ssub.s32 %s26, %s33
      %s40 = sor.u32 %s38, %s39
      %p41 = scmp.eq.s32.totalorder %s40, 0
      %s43 = sadd.s32 %s42, 1
      %s44 = scalar_select %p41, %s42, %s43
      %p47 = pneg %p41
      %p48 = scmp.eq.s32.totalorder %s18, 1
      %p49 = por %p47, %p48
      %p50 = scmp.ne.s32.totalorder %s42, %s45
      %p51 = scmp.eq.s32.totalorder %s18, 0
      %p52 = por %p50, %p51
      %p53 = scmp.ne.s32.totalorder %s42, %s45
      %p54 = scmp.eq.s32.totalorder %s23, 1
      %p55 = por %p53, %p54
      %p56 = scmp.ne.s32.totalorder %s45, %s46
      %p57 = scmp.eq.s32.totalorder %s23, 0
      %p58 = por %p56, %p57
      %p59 = scmp.ne.s32.totalorder %s45, %s46
      %p60 = scmp.eq.s32.totalorder %s24, 1
      %p61 = por %p59, %p60
      %p63 = scmp.ne.s32.totalorder %s46, %s62
      %p64 = scmp.eq.s32.totalorder %s24, 0
      %p65 = por %p63, %p64
      %s66 = ssub.s32 %s26, %s33
      %p67 = scmp.eq.s32.totalorder %s66, 0
      %s69 = sadd.s32 %s68, 1
      %s70 = scalar_select %p67, %s68, %s69
      %p73 = pneg %p67
      %p74 = scmp.eq.s32.totalorder %s18, 1
      %p75 = por %p73, %p74
      %p76 = scmp.ne.s32.totalorder %s68, %s71
      %p77 = scmp.eq.s32.totalorder %s18, 0
      %p78 = por %p76, %p77
      %p79 = scmp.ne.s32.totalorder %s68, %s71
      %p80 = scmp.eq.s32.totalorder %s23, 1
      %p81 = por %p79, %p80
      %p82 = scmp.ne.s32.totalorder %s71, %s72
      %p83 = scmp.eq.s32.totalorder %s23, 0
      %p84 = por %p82, %p83
      %p85 = scmp.ne.s32.totalorder %s71, %s72
      %p86 = scmp.eq.s32.totalorder %s24, 1
      %p87 = por %p85, %p86
      %p89 = scmp.ne.s32.totalorder %s72, %s88
      %p90 = scmp.eq.s32.totalorder %s24, 0
      %p91 = por %p89, %p90
      %s93 = sadd.s32 %s92, 1
      %p96 = scmp.eq.s32.totalorder %s18, 1
      %p97 = scmp.ne.s32.totalorder %s92, %s94
      %p98 = scmp.eq.s32.totalorder %s18, 0
      %p99 = por %p97, %p98
      %p100 = scmp.ne.s32.totalorder %s92, %s94
      %p101 = scmp.eq.s32.totalorder %s23, 1
      %p102 = por %p100, %p101
      %p103 = scmp.ne.s32.totalorder %s94, %s95
      %p104 = scmp.eq.s32.totalorder %s23, 0
      %p105 = por %p103, %p104
      %p106 = scmp.ne.s32.totalorder %s94, %s95
      %p107 = scmp.eq.s32.totalorder %s24, 1
      %p108 = por %p106, %p107
      %p110 = scmp.ne.s32.totalorder %s95, %s109
      %p111 = scmp.eq.s32.totalorder %s24, 0
      %p112 = por %p110, %p111
      %s114 = sadd.s32 %s113, 1
      %p117 = scmp.eq.s32.totalorder %s18, 1
      %p118 = scmp.ne.s32.totalorder %s113, %s115
      %p119 = scmp.eq.s32.totalorder %s18, 0
      %p120 = por %p118, %p119
      %p121 = scmp.ne.s32.totalorder %s113, %s115
      %p122 = scmp.eq.s32.totalorder %s23, 1
      %p123 = por %p121, %p122
      %p124 = scmp.ne.s32.totalorder %s115, %s116
      %p125 = scmp.eq.s32.totalorder %s23, 0
      %p126 = por %p124, %p125
      %p127 = scmp.ne.s32.totalorder %s115, %s116
      %p128 = scmp.eq.s32.totalorder %s24, 1
      %p129 = por %p127, %p128
      %p131 = scmp.ne.s32.totalorder %s116, %s130
      %p132 = scmp.eq.s32.totalorder %s24, 0
      %p133 = por %p131, %p132
      %s135 = sadd.s32 %s134, 1
      %p138 = scmp.eq.s32.totalorder %s18, 1
      %p139 = scmp.ne.s32.totalorder %s134, %s136
      %p140 = scmp.eq.s32.totalorder %s18, 0
      %p141 = por %p139, %p140
      %p142 = scmp.ne.s32.totalorder %s134, %s136
      %p143 = scmp.eq.s32.totalorder %s23, 1
      %p144 = por %p142, %p143
      %p145 = scmp.ne.s32.totalorder %s136, %s137
      %p146 = scmp.eq.s32.totalorder %s23, 0
      %p147 = por %p145, %p146
      %p148 = scmp.ne.s32.totalorder %s136, %s137
      %p149 = scmp.eq.s32.totalorder %s24, 1
      %p150 = por %p148, %p149
      %p152 = scmp.ne.s32.totalorder %s137, %s151
      %p153 = scmp.eq.s32.totalorder %s24, 0
      %p154 = por %p152, %p153
      %s155 = ssub.s32 %s25, %s37
      %p156 = scmp.eq.s32.totalorder %s155, 0
      %s158 = sadd.s32 %s157, 1
      %s159 = scalar_select %p156, %s157, %s158
      %p162 = pneg %p156
      %p163 = scmp.eq.s32.totalorder %s18, 1
      %p164 = por %p162, %p163
      %p165 = scmp.ne.s32.totalorder %s157, %s160
      %p166 = scmp.eq.s32.totalorder %s18, 0
      %p167 = por %p165, %p166
      %p168 = scmp.ne.s32.totalorder %s157, %s160
      %p169 = scmp.eq.s32.totalorder %s23, 1
      %p170 = por %p168, %p169
      %p171 = scmp.ne.s32.totalorder %s160, %s161
      %p172 = scmp.eq.s32.totalorder %s23, 0
      %p173 = por %p171, %p172
      %p174 = scmp.ne.s32.totalorder %s160, %s161
      %p175 = scmp.eq.s32.totalorder %s24, 1
      %p176 = por %p174, %p175
      %p178 = scmp.ne.s32.totalorder %s161, %s177
      %p179 = scmp.eq.s32.totalorder %s24, 0
      %p180 = por %p178, %p179
      %p181 = scmp.le.s32.totalorder 1, %s18
      %p182 = scmp.lt.s32.totalorder %s18, 3
      %p183 = pnand %p181, %p182
      %p184 = pneg %p183
      // Predicated region
      $region9: #{tpu_custom_call.1} parent=5 // pred_check
        _
      $region10: #{tpu_custom_call.1} parent=5 // pred_check_branch
        %186 = sbr.rel (%p183) target = $region12
      $region11: #{tpu_custom_call.1} parent=5 // pred_region
        %s187 = ssub.s32 %s18, 1
        // Predicated region
        $region13: #{tpu_custom_call.1} parent=11 // pred_check
          %p188 = pneg %p105
        $region14: #{tpu_custom_call.1} parent=11 // pred_check_branch
          %190 = sbr.rel (%p188) target = $region16
        $region15: #{tpu_custom_call.1} parent=11 // pred_region
          _
        $region16: #{tpu_custom_call.1} parent=11 // pred_fallthru
          _
        // Predicated region
        $region17: #{tpu_custom_call.1} parent=11 // pred_check
          %p191 = pneg %p126
        $region18: #{tpu_custom_call.1} parent=11 // pred_check_branch
          %193 = sbr.rel (%p191) target = $region20
        $region19: #{tpu_custom_call.1} parent=11 // pred_region
          %s195 = ssub.s32 1024, 1024
          %196 = vsyncadd [#allocation7], %s195
          %s197 = sshll.u32 [#allocation8], 4
          %s198 = int_to_ptr.vmem [resolvable:$true] %s197
          %203 = dma.hbm_to_vmem [thread:$0]  %s3, 1024, %s198, [#allocation7], 64, 64, 4
        $region20: #{tpu_custom_call.1} parent=11 // pred_fallthru
          _
        // Predicated region
        $region21: #{tpu_custom_call.1} parent=11 // pred_check
          %p204 = pneg %p147
        $region22: #{tpu_custom_call.1} parent=11 // pred_check_branch
          %206 = sbr.rel (%p204) target = $region24
        $region23: #{tpu_custom_call.1} parent=11 // pred_region
          _
        $region24: #{tpu_custom_call.1} parent=11 // pred_fallthru
          _
      $region12: #{tpu_custom_call.1} parent=5 // pred_fallthru
        _
      %p207 = scmp.lt.s32.totalorder %s18, 2
      // Predicated region
      $region25: #{tpu_custom_call.1} parent=5 // pred_check
        %p208 = pneg %p207
      $region26: #{tpu_custom_call.1} parent=5 // pred_check_branch
        %210 = sbr.rel (%p208) target = $region28
      $region27: #{tpu_custom_call.1} parent=5 // pred_region
        // Predicated region
        $region29: #{tpu_custom_call.1} parent=27 // pred_check
          %p211 = pneg %p52
        $region30: #{tpu_custom_call.1} parent=27 // pred_check_branch
          %213 = sbr.rel (%p211) target = $region32
        $region31: #{tpu_custom_call.1} parent=27 // pred_region
          %s214 = sand.u32 %s42, 1
          %s215 = scalar_lea.sflag [#allocation4], %s214
          %s216 = sand.u32 %s42, 1
          %s217 = smul.addr %s216, 32
          %s218 = scalar_lea.vmem [#allocation3], %s217
          %s219 = smul.u32 2, %s25
          %s220 = smul.u32 4, %s26
          %s222 = ssub.s32 512, 512
          %223 = vsyncadd %s215, %s222
          %s224 = smul.addr %s219, 8
          %s225 = sadd.s32 %s220, %s224
          %s226 = smul.addr %s225, 64
          %s227 = scalar_lea.hbm %s0, %s226
          %s228 = sshll.u32 %s218, 4
          %s229 = int_to_ptr.vmem [resolvable:$true] %s228
          %234 = dma.hbm_to_vmem [thread:$0]  %s227, 512, %s229, %s215, 512, 256, 16
        $region32: #{tpu_custom_call.1} parent=27 // pred_fallthru
          _
        // Predicated region
        $region33: #{tpu_custom_call.1} parent=27 // pred_check
          %p235 = pneg %p78
        $region34: #{tpu_custom_call.1} parent=27 // pred_check_branch
          %237 = sbr.rel (%p235) target = $region36
        $region35: #{tpu_custom_call.1} parent=27 // pred_region
          %s238 = sand.u32 %s18, 1
          %s239 = scalar_lea.sflag [#allocation7], %s238
          %s240 = sand.u32 %s68, 1
          %s241 = smul.addr %s240, 256
          %s242 = scalar_lea.vmem [#allocation6], %s241
          %s243 = smul.u32 64, %s26
          %s245 = ssub.s32 4096, 4096
          %246 = vsyncadd %s239, %s245
          %s247 = smul.addr %s243, 64
          %s248 = scalar_lea.hbm %s1, %s247
          %s249 = sshll.u32 %s242, 4
          %s250 = int_to_ptr.vmem [resolvable:$true] %s249
          %255 = dma.hbm_to_vmem [thread:$0]  %s248, 4096, %s250, %s239, 64, 64, 4
        $region36: #{tpu_custom_call.1} parent=27 // pred_fallthru
          _
      $region28: #{tpu_custom_call.1} parent=5 // pred_fallthru
        _
      %p256 = scmp.le.s32.totalorder 1, %s18
      %p257 = scmp.lt.s32.totalorder %s18, 3
      %p258 = pnand %p256, %p257
      %p259 = pneg %p258
      // Predicated region
      $region37: #{tpu_custom_call.1} parent=5 // pred_check
        _
      $region38: #{tpu_custom_call.1} parent=5 // pred_check_branch
        %261 = sbr.rel (%p258) target = $region40
      $region39: #{tpu_custom_call.1} parent=5 // pred_region
        %s262 = ssub.s32 %s18, 1
        %s263 = sand.u32 %s45, 1
        %s264 = scalar_lea.sflag [#allocation4], %s263
        %s265 = sand.u32 %s45, 1
        %s266 = smul.addr %s265, 32
        %s267 = scalar_lea.vmem [#allocation3], %s266
        // Predicated region
        $region41: #{tpu_custom_call.1} parent=39 // pred_check
          %p268 = pneg %p58
        $region42: #{tpu_custom_call.1} parent=39 // pred_check_branch
          %270 = sbr.rel (%p268) target = $region44
        $region43: #{tpu_custom_call.1} parent=39 // pred_region
          %271 = dma.done %s264, 512
        $region44: #{tpu_custom_call.1} parent=39 // pred_fallthru
          _
        %s272 = sand.u32 %s23, 1
        %s273 = scalar_lea.sflag [#allocation7], %s272
        %s274 = sand.u32 %s71, 1
        %s275 = smul.addr %s274, 256
        %s276 = scalar_lea.vmem [#allocation6], %s275
        // Predicated region
        $region45: #{tpu_custom_call.1} parent=39 // pred_check
          %p277 = pneg %p84
        $region46: #{tpu_custom_call.1} parent=39 // pred_check_branch
          %279 = sbr.rel (%p277) target = $region48
        $region47: #{tpu_custom_call.1} parent=39 // pred_region
          %280 = dma.done %s273, 4096
        $region48: #{tpu_custom_call.1} parent=39 // pred_fallthru
          _
        // Predicated region
        $region49: #{tpu_custom_call.1} parent=39 // pred_check
          %p281 = pneg %p126
        $region50: #{tpu_custom_call.1} parent=39 // pred_check_branch
          %283 = sbr.rel (%p281) target = $region52
        $region51: #{tpu_custom_call.1} parent=39 // pred_region
          %284 = dma.done [#allocation7], 1024
        $region52: #{tpu_custom_call.1} parent=39 // pred_fallthru
          _
        %s285 = sand.u32 %s45, 1
        %s286 = scalar_lea.sflag [#allocation4], %s285
        %s287 = sand.u32 %s45, 1
        %s288 = smul.addr %s287, 32
        %s289 = scalar_lea.vmem [#allocation3], %s288
        %p290 = pneg %p58
        %p291 = pneg %p55
        %s292 = sand.u32 %s23, 1
        %s293 = scalar_lea.sflag [#allocation7], %s292
        %s294 = sand.u32 %s71, 1
        %s295 = smul.addr %s294, 256
        %s296 = scalar_lea.vmem [#allocation6], %s295
        %p297 = pneg %p84
        %p298 = pneg %p81
        %p299 = pneg %p105
        %p300 = pneg %p102
        %p301 = pneg %p126
        %p302 = pneg %p123
        %p303 = pneg %p147
        %p304 = pneg %p144
        %p305 = pneg %p173
        %p306 = pneg %p170
        %s307 = smul.u32 2, %s27
        %s308 = smul.u32 4, %s28
        %s309 = smul.u32 64, %s28
        %s310 = smul.u32 2, %s27
        %p312 = scmp.eq.s32.totalorder %s28, 0
        // Predicated region
        $region53: #{tpu_custom_call.1} parent=39 // pred_check
          %p313 = pneg %p312
        $region54: #{tpu_custom_call.1} parent=39 // pred_check_branch
          %315 = sbr.rel (%p313) target = $region56
        $region55: #{tpu_custom_call.1} parent=39 // pred_region
          %316 = vst [vmem:[#allocation2] sm:$0xff] 0.0
          %317 = vst [vmem:[#allocation2 + $0x8] sm:$0xff] 0.0
        $region56: #{tpu_custom_call.1} parent=39 // pred_fallthru
          _
        %v318 = vld [vmem:[#allocation2] sm:$0xff]
        %v319 = vld [vmem:[#allocation2 + $0x8] sm:$0xff]
        %v320 = vld [vmem:[%s267] sm:$0xff]
        %v321 = vld [vmem:[%s267 + $0x8] sm:$0xff]
        %v322 = vld [vmem:[%s267 + $0x10] sm:$0xff]
        %v323 = vld [vmem:[%s267 + $0x18] sm:$0xff]
        %v324 = vld [vmem:[%s276] sm:$0xf]
        %v325 = vld [vmem:[%s276 + $0x4] sm:$0xf]
        %v326 = vld [vmem:[%s276 + $0x8] sm:$0xf]
        %v327 = vld [vmem:[%s276 + $0xc] sm:$0xf]
        %v328 = vld [vmem:[%s276 + $0x10] sm:$0xf]
        %v329 = vld [vmem:[%s276 + $0x14] sm:$0xf]
        %v330 = vld [vmem:[%s276 + $0x18] sm:$0xf]
        %v331 = vld [vmem:[%s276 + $0x1c] sm:$0xf]
        %v332 = vld [vmem:[%s276 + $0x20] sm:$0xf]
        %v333 = vld [vmem:[%s276 + $0x24] sm:$0xf]
        %v334 = vld [vmem:[%s276 + $0x28] sm:$0xf]
        %v335 = vld [vmem:[%s276 + $0x2c] sm:$0xf]
        %v336 = vld [vmem:[%s276 + $0x30] sm:$0xf]
        %v337 = vld [vmem:[%s276 + $0x34] sm:$0xf]
        %v338 = vld [vmem:[%s276 + $0x38] sm:$0xf]
        %v339 = vld [vmem:[%s276 + $0x3c] sm:$0xf]
        %v340 = vld [vmem:[%s276 + $0x40] sm:$0xf]
        %v341 = vld [vmem:[%s276 + $0x44] sm:$0xf]
        %v342 = vld [vmem:[%s276 + $0x48] sm:$0xf]
        %v343 = vld [vmem:[%s276 + $0x4c] sm:$0xf]
        %v344 = vld [vmem:[%s276 + $0x50] sm:$0xf]
        %v345 = vld [vmem:[%s276 + $0x54] sm:$0xf]
        %v346 = vld [vmem:[%s276 + $0x58] sm:$0xf]
        %v347 = vld [vmem:[%s276 + $0x5c] sm:$0xf]
        %v348 = vld [vmem:[%s276 + $0x60] sm:$0xf]
        %v349 = vld [vmem:[%s276 + $0x64] sm:$0xf]
        %v350 = vld [vmem:[%s276 + $0x68] sm:$0xf]
        %v351 = vld [vmem:[%s276 + $0x6c] sm:$0xf]
        %v352 = vld [vmem:[%s276 + $0x70] sm:$0xf]
        %v353 = vld [vmem:[%s276 + $0x74] sm:$0xf]
        %v354 = vld [vmem:[%s276 + $0x78] sm:$0xf]
        %v355 = vld [vmem:[%s276 + $0x7c] sm:$0xf]
        %v356 = vld [vmem:[%s276 + $0x80] sm:$0xf]
        %v357 = vld [vmem:[%s276 + $0x84] sm:$0xf]
        %v358 = vld [vmem:[%s276 + $0x88] sm:$0xf]
        %v359 = vld [vmem:[%s276 + $0x8c] sm:$0xf]
        %v360 = vld [vmem:[%s276 + $0x90] sm:$0xf]
        %v361 = vld [vmem:[%s276 + $0x94] sm:$0xf]
        %v362 = vld [vmem:[%s276 + $0x98] sm:$0xf]
        %v363 = vld [vmem:[%s276 + $0x9c] sm:$0xf]
        %v364 = vld [vmem:[%s276 + $0xa0] sm:$0xf]
        %v365 = vld [vmem:[%s276 + $0xa4] sm:$0xf]
        %v366 = vld [vmem:[%s276 + $0xa8] sm:$0xf]
        %v367 = vld [vmem:[%s276 + $0xac] sm:$0xf]
        %v368 = vld [vmem:[%s276 + $0xb0] sm:$0xf]
        %v369 = vld [vmem:[%s276 + $0xb4] sm:$0xf]
        %v370 = vld [vmem:[%s276 + $0xb8] sm:$0xf]
        %v371 = vld [vmem:[%s276 + $0xbc] sm:$0xf]
        %v372 = vld [vmem:[%s276 + $0xc0] sm:$0xf]
        %v373 = vld [vmem:[%s276 + $0xc4] sm:$0xf]
        %v374 = vld [vmem:[%s276 + $0xc8] sm:$0xf]
        %v375 = vld [vmem:[%s276 + $0xcc] sm:$0xf]
        %v376 = vld [vmem:[%s276 + $0xd0] sm:$0xf]
        %v377 = vld [vmem:[%s276 + $0xd4] sm:$0xf]
        %v378 = vld [vmem:[%s276 + $0xd8] sm:$0xf]
        %v379 = vld [vmem:[%s276 + $0xdc] sm:$0xf]
        %v380 = vld [vmem:[%s276 + $0xe0] sm:$0xf]
        %v381 = vld [vmem:[%s276 + $0xe4] sm:$0xf]
        %v382 = vld [vmem:[%s276 + $0xe8] sm:$0xf]
        %v383 = vld [vmem:[%s276 + $0xec] sm:$0xf]
        %v384 = vld [vmem:[%s276 + $0xf0] sm:$0xf]
        %v385 = vld [vmem:[%s276 + $0xf4] sm:$0xf]
        %v386 = vld [vmem:[%s276 + $0xf8] sm:$0xf]
        %v387 = vld [vmem:[%s276 + $0xfc] sm:$0xf]
        %v392 = vunpack.c.l.b16 %v320
        %v393 = vunpack.c.h.b16 %v320
        %v394 = vunpack.c.l.b16 %v321
        %v395 = vunpack.c.h.b16 %v321
        %v396 = vunpack.c.l.b16 %v322
        %v397 = vunpack.c.h.b16 %v322
        %v398 = vunpack.c.l.b16 %v323
        %v399 = vunpack.c.h.b16 %v323
        %v400 = vpack.c.b16 %v396, %v392
        %v401 = vpack.c.b16 %v397, %v393
        %v402 = vpack.c.b16 %v398, %v394
        %v403 = vpack.c.b16 %v399, %v395
        %v472 = vunpack.c.l.b16 %v324
        %v473 = vunpack.c.l.b16 %v325
        %v474 = vunpack.c.l.b16 %v326
        %v475 = vunpack.c.l.b16 %v327
        %v476 = vunpack.c.l.b16 %v328
        %v477 = vunpack.c.l.b16 %v329
        %v478 = vunpack.c.l.b16 %v330
        %v479 = vunpack.c.l.b16 %v331
        %v480 = vunpack.c.l.b16 %v332
        %v481 = vunpack.c.l.b16 %v333
        %v482 = vunpack.c.l.b16 %v334
        %v483 = vunpack.c.l.b16 %v335
        %v484 = vunpack.c.l.b16 %v336
        %v485 = vunpack.c.l.b16 %v337
        %v486 = vunpack.c.l.b16 %v338
        %v487 = vunpack.c.l.b16 %v339
        %v488 = vunpack.c.l.b16 %v340
        %v489 = vunpack.c.l.b16 %v341
        %v490 = vunpack.c.l.b16 %v342
        %v491 = vunpack.c.l.b16 %v343
        %v492 = vunpack.c.l.b16 %v344
        %v493 = vunpack.c.l.b16 %v345
        %v494 = vunpack.c.l.b16 %v346
        %v495 = vunpack.c.l.b16 %v347
        %v496 = vunpack.c.l.b16 %v348
        %v497 = vunpack.c.l.b16 %v349
        %v498 = vunpack.c.l.b16 %v350
        %v499 = vunpack.c.l.b16 %v351
        %v500 = vunpack.c.l.b16 %v352
        %v501 = vunpack.c.l.b16 %v353
        %v502 = vunpack.c.l.b16 %v354
        %v503 = vunpack.c.l.b16 %v355
        %v504 = vunpack.c.l.b16 %v356
        %v505 = vunpack.c.l.b16 %v357
        %v506 = vunpack.c.l.b16 %v358
        %v507 = vunpack.c.l.b16 %v359
        %v508 = vunpack.c.l.b16 %v360
        %v509 = vunpack.c.l.b16 %v361
        %v510 = vunpack.c.l.b16 %v362
        %v511 = vunpack.c.l.b16 %v363
        %v512 = vunpack.c.l.b16 %v364
        %v513 = vunpack.c.l.b16 %v365
        %v514 = vunpack.c.l.b16 %v366
        %v515 = vunpack.c.l.b16 %v367
        %v516 = vunpack.c.l.b16 %v368
        %v517 = vunpack.c.l.b16 %v369
        %v518 = vunpack.c.l.b16 %v370
        %v519 = vunpack.c.l.b16 %v371
        %v520 = vunpack.c.l.b16 %v372
        %v521 = vunpack.c.l.b16 %v373
        %v522 = vunpack.c.l.b16 %v374
        %v523 = vunpack.c.l.b16 %v375
        %v524 = vunpack.c.l.b16 %v376
        %v525 = vunpack.c.l.b16 %v377
        %v526 = vunpack.c.l.b16 %v378
        %v527 = vunpack.c.l.b16 %v379
        %v528 = vunpack.c.l.b16 %v380
        %v529 = vunpack.c.l.b16 %v381
        %v530 = vunpack.c.l.b16 %v382
        %v531 = vunpack.c.l.b16 %v383
        %v532 = vunpack.c.l.b16 %v384
        %v533 = vunpack.c.l.b16 %v385
        %v534 = vunpack.c.l.b16 %v386
        %v535 = vunpack.c.l.b16 %v387
        %v536 = vpack.c.b16 %v473, %v472
        %v537 = vpack.c.b16 %v475, %v474
        %v538 = vpack.c.b16 %v477, %v476
        %v539 = vpack.c.b16 %v479, %v478
        %v540 = vpack.c.b16 %v481, %v480
        %v541 = vpack.c.b16 %v483, %v482
        %v542 = vpack.c.b16 %v485, %v484
        %v543 = vpack.c.b16 %v487, %v486
        %v544 = vpack.c.b16 %v489, %v488
        %v545 = vpack.c.b16 %v491, %v490
        %v546 = vpack.c.b16 %v493, %v492
        %v547 = vpack.c.b16 %v495, %v494
        %v548 = vpack.c.b16 %v497, %v496
        %v549 = vpack.c.b16 %v499, %v498
        %v550 = vpack.c.b16 %v501, %v500
        %v551 = vpack.c.b16 %v503, %v502
        %v552 = vpack.c.b16 %v505, %v504
        %v553 = vpack.c.b16 %v507, %v506
        %v554 = vpack.c.b16 %v509, %v508
        %v555 = vpack.c.b16 %v511, %v510
        %v556 = vpack.c.b16 %v513, %v512
        %v557 = vpack.c.b16 %v515, %v514
        %v558 = vpack.c.b16 %v517, %v516
        %v559 = vpack.c.b16 %v519, %v518
        %v560 = vpack.c.b16 %v521, %v520
        %v561 = vpack.c.b16 %v523, %v522
        %v562 = vpack.c.b16 %v525, %v524
        %v563 = vpack.c.b16 %v527, %v526
        %v564 = vpack.c.b16 %v529, %v528
        %v565 = vpack.c.b16 %v531, %v530
        %v566 = vpack.c.b16 %v533, %v532
        %v567 = vpack.c.b16 %v535, %v534
        %600 = vmatprep.subr.bf16.mxu0 0
        %601 = vmatpush1.bf16.msra.mxu0 %v543
        %602 = vmatprep.subr.bf16.mxu0 0
        %603 = vmatpush1.bf16.msra.mxu0 %v542
        %604 = vmatprep.subr.bf16.mxu0 0
        %605 = vmatpush1.bf16.msra.mxu0 %v541
        %606 = vmatprep.subr.bf16.mxu0 0
        %607 = vmatpush1.bf16.msra.mxu0 %v540
        %608 = vmatprep.subr.bf16.mxu0 0
        %609 = vmatpush1.bf16.msra.mxu0 %v539
        %610 = vmatprep.subr.bf16.mxu0 0
        %611 = vmatpush1.bf16.msra.mxu0 %v538
        %612 = vmatprep.subr.bf16.mxu0 0
        %613 = vmatpush1.bf16.msra.mxu0 %v537
        %614 = vmatprep.subr.bf16.mxu0 0
        %615 = vmatpush1.bf16.msra.mxu0 %v536
        %616 = vmatprep.subr.bf16.mxu0 0
        %617 = vmatpush2.bf16.msra.mxu0 %v551
        %618 = vmatprep.subr.bf16.mxu0 0
        %619 = vmatpush2.bf16.msra.mxu0 %v550
        %620 = vmatprep.subr.bf16.mxu0 0
        %621 = vmatpush2.bf16.msra.mxu0 %v549
        %622 = vmatprep.subr.bf16.mxu0 0
        %623 = vmatpush2.bf16.msra.mxu0 %v548
        %624 = vmatprep.subr.bf16.mxu0 0
        %625 = vmatpush2.bf16.msra.mxu0 %v547
        %626 = vmatprep.subr.bf16.mxu0 0
        %627 = vmatpush2.bf16.msra.mxu0 %v546
        %628 = vmatprep.subr.bf16.mxu0 0
        %629 = vmatpush2.bf16.msra.mxu0 %v545
        %630 = vmatprep.subr.bf16.mxu0 0
        %631 = vmatpush2.bf16.msra.mxu0 %v544
        %632 = vmatprep.mubr.bf16.mxu0 %v401
        %633 = vmatmul.mubr.bf16.gmra.mxu0 %v400
        %v634 = vpop.f32.mrf.mxu0
        %v635 = vadd.f32 0.0, %v634
        %v636 = vpop.f32.mrf.mxu0
        %v637 = vpop.f32.mrf.mxu0
        %v638 = vadd.f32 0.0, %v637
        %v639 = vpop.f32.mrf.mxu0
        %640 = vdwg.mxu0
        %641 = vmatprep.subr.bf16.mxu0 0
        %642 = vmatpush1.bf16.msra.mxu0 %v559
        %643 = vmatprep.subr.bf16.mxu0 0
        %644 = vmatpush1.bf16.msra.mxu0 %v558
        %645 = vmatprep.subr.bf16.mxu0 0
        %646 = vmatpush1.bf16.msra.mxu0 %v557
        %647 = vmatprep.subr.bf16.mxu0 0
        %648 = vmatpush1.bf16.msra.mxu0 %v556
        %649 = vmatprep.subr.bf16.mxu0 0
        %650 = vmatpush1.bf16.msra.mxu0 %v555
        %651 = vmatprep.subr.bf16.mxu0 0
        %652 = vmatpush1.bf16.msra.mxu0 %v554
        %653 = vmatprep.subr.bf16.mxu0 0
        %654 = vmatpush1.bf16.msra.mxu0 %v553
        %655 = vmatprep.subr.bf16.mxu0 0
        %656 = vmatpush1.bf16.msra.mxu0 %v552
        %657 = vmatprep.subr.bf16.mxu0 0
        %658 = vmatpush2.bf16.msra.mxu0 %v567
        %659 = vmatprep.subr.bf16.mxu0 0
        %660 = vmatpush2.bf16.msra.mxu0 %v566
        %661 = vmatprep.subr.bf16.mxu0 0
        %662 = vmatpush2.bf16.msra.mxu0 %v565
        %663 = vmatprep.subr.bf16.mxu0 0
        %664 = vmatpush2.bf16.msra.mxu0 %v564
        %665 = vmatprep.subr.bf16.mxu0 0
        %666 = vmatpush2.bf16.msra.mxu0 %v563
        %667 = vmatprep.subr.bf16.mxu0 0
        %668 = vmatpush2.bf16.msra.mxu0 %v562
        %669 = vmatprep.subr.bf16.mxu0 0
        %670 = vmatpush2.bf16.msra.mxu0 %v561
        %671 = vmatprep.subr.bf16.mxu0 0
        %672 = vmatpush2.bf16.msra.mxu0 %v560
        %673 = vmatprep.mubr.bf16.mxu0 %v403
        %674 = vmatmul.mubr.bf16.gmra.mxu0 %v402
        %v675 = vpop.f32.mrf.mxu0
        %v676 = vadd.f32 %v635, %v675
        %v677 = vpop.f32.mrf.mxu0
        %v678 = vpop.f32.mrf.mxu0
        %v679 = vadd.f32 %v638, %v678
        %v680 = vpop.f32.mrf.mxu0
        %681 = vdwg.mxu0
        %v682 = vadd.f32 %v318, %v676
        %v683 = vadd.f32 %v319, %v679
        %684 = vst [vmem:[#allocation2] sm:$0xff] %v682
        %685 = vst [vmem:[#allocation2 + $0x8] sm:$0xff] %v683
        %p686 = scmp.eq.s32.totalorder %s28, 1
        // Predicated region
        $region57: #{tpu_custom_call.1} parent=39 // pred_check
          %p687 = pneg %p686
        $region58: #{tpu_custom_call.1} parent=39 // pred_check_branch
          %689 = sbr.rel (%p687) target = $region60
        $region59: #{tpu_custom_call.1} parent=39 // pred_region
          %v690 = vld [vmem:[#allocation2] sm:$0xff]
          %v691 = vld [vmem:[#allocation2 + $0x8] sm:$0xff]
          %v692 = vld [vmem:[%s2] sm:$0x1]
          %v694 = vlaneseq
          %v695 = vshrl.u32 %v694, 7
          %v696 = vsub.s32 0, %v695
          %v697 = vrot.slane %v692, %v696
          %v699 = vadd.f32 %v690, %v697
          %v700 = vadd.f32 %v691, %v697
          %v701 = vmax.f32 %v699, 0.0
          %v702 = vmax.f32 %v700, 0.0
          %v703 = vpack.c.bf16 %v702, %v701
          %v704 = vld [vmem:[#allocation8] sm:$0xf]
          %v705 = vld [vmem:[#allocation8 + $0x4] sm:$0xf]
          %v706 = vld [vmem:[#allocation8 + $0x8] sm:$0xf]
          %v707 = vld [vmem:[#allocation8 + $0xc] sm:$0xf]
          %v708 = vld [vmem:[#allocation8 + $0x10] sm:$0xf]
          %v709 = vld [vmem:[#allocation8 + $0x14] sm:$0xf]
          %v710 = vld [vmem:[#allocation8 + $0x18] sm:$0xf]
          %v711 = vld [vmem:[#allocation8 + $0x1c] sm:$0xf]
          %v712 = vld [vmem:[#allocation8 + $0x20] sm:$0xf]
          %v713 = vld [vmem:[#allocation8 + $0x24] sm:$0xf]
          %v714 = vld [vmem:[#allocation8 + $0x28] sm:$0xf]
          %v715 = vld [vmem:[#allocation8 + $0x2c] sm:$0xf]
          %v716 = vld [vmem:[#allocation8 + $0x30] sm:$0xf]
          %v717 = vld [vmem:[#allocation8 + $0x34] sm:$0xf]
          %v718 = vld [vmem:[#allocation8 + $0x38] sm:$0xf]
          %v719 = vld [vmem:[#allocation8 + $0x3c] sm:$0xf]
          %v720 = vld [vmem:[%s4] sm:$0x1]
          %v722 = vlaneseq
          %v723 = vshrl.u32 %v722, 7
          %v724 = vsub.s32 0, %v723
          %v725 = vrot.slane %v720, %v724
          %v743 = vunpack.c.l.b16 %v704
          %v744 = vunpack.c.l.b16 %v705
          %v745 = vunpack.c.l.b16 %v706
          %v746 = vunpack.c.l.b16 %v707
          %v747 = vunpack.c.l.b16 %v708
          %v748 = vunpack.c.l.b16 %v709
          %v749 = vunpack.c.l.b16 %v710
          %v750 = vunpack.c.l.b16 %v711
          %v751 = vunpack.c.l.b16 %v712
          %v752 = vunpack.c.l.b16 %v713
          %v753 = vunpack.c.l.b16 %v714
          %v754 = vunpack.c.l.b16 %v715
          %v755 = vunpack.c.l.b16 %v716
          %v756 = vunpack.c.l.b16 %v717
          %v757 = vunpack.c.l.b16 %v718
          %v758 = vunpack.c.l.b16 %v719
          %v759 = vpack.c.b16 %v744, %v743
          %v760 = vpack.c.b16 %v746, %v745
          %v761 = vpack.c.b16 %v748, %v747
          %v762 = vpack.c.b16 %v750, %v749
          %v763 = vpack.c.b16 %v752, %v751
          %v764 = vpack.c.b16 %v754, %v753
          %v765 = vpack.c.b16 %v756, %v755
          %v766 = vpack.c.b16 %v758, %v757
          %775 = vmatprep.subr.bf16.mxu0 0
          %776 = vmatpush1.bf16.msra.mxu0 %v766
          %777 = vmatprep.subr.bf16.mxu0 0
          %778 = vmatpush1.bf16.msra.mxu0 %v765
          %779 = vmatprep.subr.bf16.mxu0 0
          %780 = vmatpush1.bf16.msra.mxu0 %v764
          %781 = vmatprep.subr.bf16.mxu0 0
          %782 = vmatpush1.bf16.msra.mxu0 %v763
          %783 = vmatprep.subr.bf16.mxu0 0
          %784 = vmatpush1.bf16.msra.mxu0 %v762
          %785 = vmatprep.subr.bf16.mxu0 0
          %786 = vmatpush1.bf16.msra.mxu0 %v761
          %787 = vmatprep.subr.bf16.mxu0 0
          %788 = vmatpush1.bf16.msra.mxu0 %v760
          %789 = vmatprep.subr.bf16.mxu0 0
          %790 = vmatpush1.bf16.msra.mxu0 %v759
          %791 = vmatprep.subr.bf16.mxu0 0
          %792 = vmatpush2.bf16.msra.mxu0 0
          %793 = vmatprep.subr.bf16.mxu0 0
          %794 = vmatpush2.bf16.msra.mxu0 0
          %795 = vmatprep.subr.bf16.mxu0 0
          %796 = vmatpush2.bf16.msra.mxu0 0
          %797 = vmatprep.subr.bf16.mxu0 0
          %798 = vmatpush2.bf16.msra.mxu0 0
          %799 = vmatprep.subr.bf16.mxu0 0
          %800 = vmatpush2.bf16.msra.mxu0 0
          %801 = vmatprep.subr.bf16.mxu0 0
          %802 = vmatpush2.bf16.msra.mxu0 0
          %803 = vmatprep.subr.bf16.mxu0 0
          %804 = vmatpush2.bf16.msra.mxu0 0
          %805 = vmatprep.subr.bf16.mxu0 0
          %806 = vmatpush2.bf16.msra.mxu0 0
          %807 = vmatprep.mubr.bf16.mxu0 0
          %808 = vmatmul.mubr.bf16.gmra.mxu0 %v703
          %v809 = vpop.f32.mrf.mxu0
          %v810 = vadd.f32 %v725, %v809
          %v811 = vpop.f32.mrf.mxu0
          %v812 = vpop.f32.mrf.mxu0
          %v813 = vadd.f32 %v725, %v812
          %v814 = vpop.f32.mrf.mxu0
          %815 = vdwg.mxu0
          %816 = vst [vmem:[#allocation9] sm:$0xff] %v810
          %817 = vst [vmem:[#allocation9 + $0x8] sm:$0xff] %v813
        $region60: #{tpu_custom_call.1} parent=39 // pred_fallthru
          _
        // Predicated region
        $region61: #{tpu_custom_call.1} parent=39 // pred_check
          %p818 = pneg %p170
        $region62: #{tpu_custom_call.1} parent=39 // pred_check_branch
          %820 = sbr.rel (%p818) target = $region64
        $region63: #{tpu_custom_call.1} parent=39 // pred_region
          %s821 = smul.u32 2, %s27
          %s823 = ssub.s32 256, 256
          %824 = vsyncadd [#allocation5], %s823
          %s825 = smul.addr %s821, 128
          %s826 = scalar_lea.hbm %s5, %s825
          %s827 = sshll.u32 [#allocation9], 4
          %s828 = int_to_ptr.vmem [resolvable:$true] %s827
          %833 = dma.vmem_to_hbm [thread:$0]  %s828, 256, %s826, [#allocation5], 128, 128, 8
        $region64: #{tpu_custom_call.1} parent=39 // pred_fallthru
          _
        // Predicated region
        $region65: #{tpu_custom_call.1} parent=39 // pred_check
          %p834 = pneg %p170
        $region66: #{tpu_custom_call.1} parent=39 // pred_check_branch
          %836 = sbr.rel (%p834) target = $region68
        $region67: #{tpu_custom_call.1} parent=39 // pred_region
          %837 = dma.done [#allocation5], 256
        $region68: #{tpu_custom_call.1} parent=39 // pred_fallthru
          _
      $region40: #{tpu_custom_call.1} parent=5 // pred_fallthru
        _
      %p838 = scmp.le.s32.totalorder 2, %s18
      // Predicated region
      $region69: #{tpu_custom_call.1} parent=5 // pred_check
        %p839 = pneg %p838
      $region70: #{tpu_custom_call.1} parent=5 // pred_check_branch
        %841 = sbr.rel (%p839) target = $region72
      $region71: #{tpu_custom_call.1} parent=5 // pred_region
        %s842 = ssub.s32 %s18, 2
      $region72: #{tpu_custom_call.1} parent=5 // pred_fallthru
        _
    $region6: #{tpu_custom_call.1} parent=1 // loop_footer
      %s22 = sadd.s32 1, %s18
    $region7: #{tpu_custom_call.1} parent=1 // loop_footer_branch
      %17 = sbr.rel target = $region3
    $region8: #{tpu_custom_call.1} parent=1 // loop_exit
      _
    %843 = vsyncpa [#allocation4], 1
    %s844 = scalar_lea.sflag [#allocation4], 1
    %845 = vsyncpa %s844, 1
    %846 = vsyncpa [#allocation7], 1
    %s847 = scalar_lea.sflag [#allocation7], 1
    %848 = vsyncpa %s847, 1
    %849 = vsyncpa [#allocation5], 1
    %s850 = scalar_lea.sflag [#allocation5], 1
    %851 = vsyncpa %s850, 1

</llo_original>
